<compile_context>
chip_gen: v7x
topology: tpu7x:2x2x1
jax: 0.10.0
libtpu: 0.0.40
codegen_flags: <defaults>
</compile_context>

<pallas_src>
import functools

import jax
import jax.numpy as jnp
from jax import lax
from jax.experimental import pallas as pl
from jax.experimental.pallas import tpu as pltpu

LOG_STD_MAX = 2.0
LOG_STD_MIN = -5.0
# Folded affine: logstd = LOG_STD_MIN + 0.5*(MAX-MIN)*(tanh(z)+1) = OFFSET + SCALE*tanh(z)
_LS_SCALE = 0.5 * (LOG_STD_MAX - LOG_STD_MIN)     # 3.5
_LS_OFFSET = LOG_STD_MIN + _LS_SCALE              # -1.5


def _round_up(n, m):
    return ((n + m - 1) // m) * m


# ---------------------------------------------------------------------------
# Kernel A: batch-major layout (rows = batch).  Used for small batches where a
# transpose to the lane-dense layout isn't worth it.
#   x:(TB,S)  ws:(S,H)  bs:(1,H)  wh:(H,2A)  bh:(1,2A)  out:(TB,2A)
# ---------------------------------------------------------------------------
def _actor_kernel_rows(x_ref, ws_ref, bs_ref, wh_ref, bh_ref, out_ref, *, action_dim):
    x = x_ref[...]
    h = jnp.dot(x, ws_ref[...], preferred_element_type=jnp.float32) + bs_ref[...]
    h = jnp.maximum(h, 0.0)
    y = jnp.dot(h.astype(wh_ref.dtype), wh_ref[...],
                preferred_element_type=jnp.float32) + bh_ref[...]
    # Lanes [0, A) are the mean head, lanes [A, 2A) are the log-std head.
    # tanh runs on the EUP slot (free relative to VALU); select with a lane mask
    # instead of slice+concat (which would cross the lane tile and add copies).
    lane = lax.broadcasted_iota(jnp.int32, y.shape, dimension=1)
    squashed = _LS_OFFSET + _LS_SCALE * jnp.tanh(y)
    out_ref[...] = jnp.where(lane >= action_dim, squashed, y)


# ---------------------------------------------------------------------------
# Kernel B: lane-dense layout (lanes = batch).  Used for large batches.
#   xT:(S,TB)  wsT:(H,S)  bsT:(H,1)  whT:(2A,H)  bhT:(2A,1)  outT:(2A,TB)
# ---------------------------------------------------------------------------
def _actor_kernel_lanes(xT_ref, wsT_ref, bsT_ref, whT_ref, bhT_ref, outT_ref, *, action_dim):
    xT = xT_ref[...]
    h = jnp.dot(wsT_ref[...], xT, preferred_element_type=jnp.float32) + bsT_ref[...]
    h = jnp.maximum(h, 0.0)
    y = jnp.dot(whT_ref[...], h.astype(whT_ref.dtype),
                preferred_element_type=jnp.float32) + bhT_ref[...]
    # Rows [0, A) are the mean head, rows [A, 2A) are the log-std head.
    row = lax.broadcasted_iota(jnp.int32, y.shape, dimension=0)
    squashed = _LS_OFFSET + _LS_SCALE * jnp.tanh(y)
    outT_ref[...] = jnp.where(row >= action_dim, squashed, y)


def continuous_soft_actor_forward(x, params, *, compute_dtype=jnp.float32,
                                  block_batch=None, batch_on_lanes=None):
    """Fused actor forward pass.

    x: (B, state_dim) float32
    params: dict with ws (S,H), bs (1,H), wm (H,A), bm (1,A), wl (H,A), bl (1,A)
    compute_dtype: dtype for the MXU operands (x and weights).  jnp.bfloat16 is
        recommended on v5e/v6e; accumulation and biases stay float32.
    returns (act_mean, act_logstd), each (B, A) float32
    """
    B, S = x.shape
    H = params["ws"].shape[1]
    A = params["wm"].shape[1]

    # Fuse the two heads into one (H, 2A) weight / (1, 2A) bias.
    wh = jnp.concatenate([params["wm"], params["wl"]], axis=1)
    bh = jnp.concatenate([params["bm"], params["bl"]], axis=1)
    ws, bs = params["ws"], params["bs"]

    ws = ws.astype(compute_dtype)
    wh = wh.astype(compute_dtype)
    xk = x.astype(compute_dtype)
    bs = bs.astype(jnp.float32)
    bh = bh.astype(jnp.float32)

    if batch_on_lanes is None:
        batch_on_lanes = B >= 128

    if batch_on_lanes:
        # ----- lane-dense path: batch on the 128-wide lane dimension -----
        tb = block_batch if block_batch is not None else 512
        tb = max(128, min(_round_up(tb, 128), _round_up(B, 128)))
        b_pad = _round_up(B, tb)

        xT = jnp.transpose(xk, (1, 0))                      # (S, B)
        if b_pad != B:
            xT = jnp.pad(xT, ((0, 0), (0, b_pad - B)))
        wsT = jnp.transpose(ws, (1, 0))                     # (H, S)
        whT = jnp.transpose(wh, (1, 0))                     # (2A, H)
        bsT = jnp.transpose(bs, (1, 0))                     # (H, 1)
        bhT = jnp.transpose(bh, (1, 0))                     # (2A, 1)

        grid = (b_pad // tb,)
        outT = pl.pallas_call(
            functools.partial(_actor_kernel_lanes, action_dim=A),
            out_shape=jax.ShapeDtypeStruct((2 * A, b_pad), jnp.float32),
            grid=grid,
            in_specs=[
                pl.BlockSpec((S, tb), lambda i: (0, i)),        # x tile, pipelined
                pl.BlockSpec((H, S), lambda i: (0, 0)),         # weights resident
                pl.BlockSpec((H, 1), lambda i: (0, 0)),
                pl.BlockSpec((2 * A, H), lambda i: (0, 0)),
                pl.BlockSpec((2 * A, 1), lambda i: (0, 0)),
            ],
            out_specs=pl.BlockSpec((2 * A, tb), lambda i: (0, i)),
            compiler_params=pltpu.CompilerParams(
                dimension_semantics=("parallel",)),
        )(xT, wsT, bsT, whT, bhT)

        mean = jnp.transpose(outT[:A, :B], (1, 0))
        logstd = jnp.transpose(outT[A:, :B], (1, 0))
        return mean, logstd

    # ----- batch-major path (small B): rows = batch, packed (B, 2A) output -----
    tb = block_batch if block_batch is not None else min(1024, _round_up(B, 8))
    tb = max(8, _round_up(tb, 8))
    b_pad = _round_up(B, tb)
    xp = jnp.pad(xk, ((0, b_pad - B), (0, 0))) if b_pad != B else xk

    grid = (b_pad // tb,)
    out = pl.pallas_call(
        functools.partial(_actor_kernel_rows, action_dim=A),
        out_shape=jax.ShapeDtypeStruct((b_pad, 2 * A), jnp.float32),
        grid=grid,
        in_specs=[
            pl.BlockSpec((tb, S), lambda i: (i, 0)),            # x tile, pipelined
            pl.BlockSpec((S, H), lambda i: (0, 0)),             # weights resident
            pl.BlockSpec((1, H), lambda i: (0, 0)),
            pl.BlockSpec((H, 2 * A), lambda i: (0, 0)),
            pl.BlockSpec((1, 2 * A), lambda i: (0, 0)),
        ],
        out_specs=pl.BlockSpec((tb, 2 * A), lambda i: (i, 0)),
        compiler_params=pltpu.CompilerParams(
            dimension_semantics=("parallel",)),
    )(xp, ws, bs, wh, bh)

    return out[:B, :A], out[:B, A:]


def init_params(key, state_dim, hidden_dim, action_dim):
    """Deterministic init mimicking PyTorch nn.Linear default (uniform +-1/sqrt(fan_in))."""
    def linear(key, fan_in, fan_out):
        kw, kb = jax.random.split(key)
        bound = 1.0 / jnp.sqrt(jnp.float32(fan_in))
        w = jax.random.uniform(kw, (fan_in, fan_out), jnp.float32, -bound, bound)
        b = jax.random.uniform(kb, (1, fan_out), jnp.float32, -bound, bound)
        return w, b

    k1, k2, k3 = jax.random.split(key, 3)
    ws, bs = linear(k1, state_dim, hidden_dim)
    wm, bm = linear(k2, hidden_dim, action_dim)
    wl, bl = linear(k3, hidden_dim, action_dim)
    return {"ws": ws, "bs": bs, "wm": wm, "bm": bm, "wl": wl, "bl": bl}


def reference_forward(x, p):
    h = jnp.maximum(x @ p["ws"] + p["bs"], 0.0)
    mean = h @ p["wm"] + p["bm"]
    ls = jnp.tanh(h @ p["wl"] + p["bl"])
    ls = LOG_STD_MIN + 0.5 * (LOG_STD_MAX - LOG_STD_MIN) * (ls + 1.0)
    return mean, ls


if __name__ == "__main__":
    key = jax.random.PRNGKey(0)
    k_x, k_p, k_xb = jax.random.split(key, 3)

    batch = 8
    state_dim = 16
    hidden_dim = 64   # hidden_shared=[64]
    action_dim = 4

    x = jax.random.normal(k_x, (batch, state_dim), jnp.float32)
    params = init_params(k_p, state_dim, hidden_dim, action_dim)

    # Small batch -> batch-major path.
    mean, logstd = continuous_soft_actor_forward(x, params)
    jax.block_until_ready((mean, logstd))
    ref_mean, ref_logstd = reference_forward(x, params)
    assert jnp.allclose(mean, ref_mean, atol=1e-5, rtol=1e-5)
    assert jnp.allclose(logstd, ref_logstd, atol=1e-5, rtol=1e-5)
    assert mean.shape == (batch, action_dim) and logstd.shape == (batch, action_dim)

    # Large batch -> lane-dense (batch-on-lanes) path.
    big_batch = 512
    xb = jax.random.normal(k_xb, (big_batch, state_dim), jnp.float32)
    mean_b, logstd_b = continuous_soft_actor_forward(xb, params)
    jax.block_until_ready((mean_b, logstd_b))
    ref_mb, ref_lb = reference_forward(xb, params)
    assert jnp.allclose(mean_b, ref_mb, atol=1e-5, rtol=1e-5)
    assert jnp.allclose(logstd_b, ref_lb, atol=1e-5, rtol=1e-5)
    assert mean_b.shape == (big_batch, action_dim)

    # bf16 matmul operands (v5e/v6e MXU-native). Tolerance is deliberately looser
    # (~1e-1) because inputs/weights are rounded to bf16; accumulation stays f32.
    mean_bf, logstd_bf = continuous_soft_actor_forward(
        xb, params, compute_dtype=jnp.bfloat16)
    jax.block_until_ready((mean_bf, logstd_bf))
    assert jnp.allclose(mean_bf, ref_mb, atol=1e-1, rtol=1e-1)
    assert jnp.allclose(logstd_bf, ref_lb, atol=1e-1, rtol=1e-1)

    print("KERNEL_OK")
</pallas_src>

<mosaic_0001>
module attributes {stable_mosaic.version = 11 : i64} {
  func.func @_actor_kernel_rows(%arg0: i32, %arg1: memref<8x16xf32, #tpu.memory_space<vmem>>, %arg2: memref<16x64xf32, #tpu.memory_space<vmem>>, %arg3: memref<1x64xf32, #tpu.memory_space<vmem>>, %arg4: memref<64x8xf32, #tpu.memory_space<vmem>>, %arg5: memref<1x8xf32, #tpu.memory_space<vmem>>, %arg6: memref<8x8xf32, #tpu.memory_space<vmem>>) attributes {dimension_semantics = [#tpu.dimension_semantics<parallel>], iteration_bounds = array<i64: 1>, scalar_prefetch = 0 : i64, scratch_operands = 0 : i64, tpu.core_type = #tpu.core_type<tc>, window_params = [{transform_indices = @transform_0, window_bounds = array<i64: 8, 16>}, {pipeline_mode = #tpu.pipeline_mode<synchronous>, transform_indices = @transform_1, window_bounds = array<i64: 16, 64>}, {pipeline_mode = #tpu.pipeline_mode<synchronous>, transform_indices = @transform_2, window_bounds = array<i64: 1, 64>}, {pipeline_mode = #tpu.pipeline_mode<synchronous>, transform_indices = @transform_3, window_bounds = array<i64: 64, 8>}, {pipeline_mode = #tpu.pipeline_mode<synchronous>, transform_indices = @transform_4, window_bounds = array<i64: 1, 8>}, {transform_indices = @transform_5, window_bounds = array<i64: 8, 8>}]} {
    %c0 = arith.constant 0 : index
    %c0_0 = arith.constant 0 : index
    %0 = vector.load %arg1[%c0, %c0_0] : memref<8x16xf32, #tpu.memory_space<vmem>>, vector<8x16xf32>
    %c0_1 = arith.constant 0 : index
    %c0_2 = arith.constant 0 : index
    %1 = vector.load %arg2[%c0_1, %c0_2] : memref<16x64xf32, #tpu.memory_space<vmem>>, vector<16x64xf32>
    %cst = arith.constant dense<0.000000e+00> : vector<8x64xf32>
    %2 = tpu.matmul %0, %1, %cst {dimension_numbers = #tpu.dot_dimension_numbers<[1], [0], [0], [1], [0, 0, 1, 1], [], []>} : vector<8x16xf32>, vector<16x64xf32>, vector<8x64xf32> -> vector<8x64xf32>
    %c0_3 = arith.constant 0 : index
    %c0_4 = arith.constant 0 : index
    %3 = vector.load %arg3[%c0_3, %c0_4] : memref<1x64xf32, #tpu.memory_space<vmem>>, vector<1x64xf32>
    %4 = vector.broadcast %3 : vector<1x64xf32> to vector<8x64xf32>
    %5 = arith.addf %2, %4 : vector<8x64xf32>
    %cst_5 = arith.constant 0.000000e+00 : f32
    %6 = vector.broadcast %cst_5 : f32 to vector<8x64xf32>
    %7 = arith.maximumf %5, %6 : vector<8x64xf32>
    %c0_6 = arith.constant 0 : index
    %c0_7 = arith.constant 0 : index
    %8 = vector.load %arg4[%c0_6, %c0_7] : memref<64x8xf32, #tpu.memory_space<vmem>>, vector<64x8xf32>
    %cst_8 = arith.constant dense<0.000000e+00> : vector<8x8xf32>
    %9 = tpu.matmul %7, %8, %cst_8 {dimension_numbers = #tpu.dot_dimension_numbers<[1], [0], [0], [1], [0, 0, 1, 1], [], []>} : vector<8x64xf32>, vector<64x8xf32>, vector<8x8xf32> -> vector<8x8xf32>
    %c0_9 = arith.constant 0 : index
    %c0_10 = arith.constant 0 : index
    %10 = vector.load %arg5[%c0_9, %c0_10] : memref<1x8xf32, #tpu.memory_space<vmem>>, vector<1x8xf32>
    %11 = vector.broadcast %10 : vector<1x8xf32> to vector<8x8xf32>
    %12 = arith.addf %9, %11 : vector<8x8xf32>
    %13 = tpu.iota {dimensions = array<i32: 1>} : vector<8x8xi32>
    %14 = math.tanh %12 : vector<8x8xf32>
    %cst_11 = arith.constant 3.500000e+00 : f32
    %15 = vector.broadcast %cst_11 : f32 to vector<8x8xf32>
    %16 = arith.mulf %15, %14 : vector<8x8xf32>
    %cst_12 = arith.constant -1.500000e+00 : f32
    %17 = vector.broadcast %cst_12 : f32 to vector<8x8xf32>
    %18 = arith.addf %17, %16 : vector<8x8xf32>
    %c4_i32 = arith.constant 4 : i32
    %19 = vector.broadcast %c4_i32 : i32 to vector<8x8xi32>
    %20 = arith.cmpi sge, %13, %19 : vector<8x8xi32>
    %21 = arith.select %20, %18, %12 : vector<8x8xi1>, vector<8x8xf32>
    %c0_13 = arith.constant 0 : index
    %c0_14 = arith.constant 0 : index
    %22 = vector.load %arg6[%c0_13, %c0_14] : memref<8x8xf32, #tpu.memory_space<vmem>>, vector<8x8xf32>
    tpu.vector_store %arg6[%c0_13, %c0_14], %21 {strides = array<i32>} : memref<8x8xf32, #tpu.memory_space<vmem>>, vector<8x8xf32>,
    return
  }
  func.func @transform_0(%arg0: i32) -> (i32, i32) {
    %c0_i32 = arith.constant 0 : i32
    %c0_i32_0 = arith.constant 0 : i32
    return %arg0, %c0_i32 : i32, i32
  }
  func.func @transform_1(%arg0: i32) -> (i32, i32) {
    %c0_i32 = arith.constant 0 : i32
    %c0_i32_0 = arith.constant 0 : i32
    %c0_i32_1 = arith.constant 0 : i32
    return %c0_i32, %c0_i32_0 : i32, i32
  }
  func.func @transform_2(%arg0: i32) -> (i32, i32) {
    %c0_i32 = arith.constant 0 : i32
    %c0_i32_0 = arith.constant 0 : i32
    %c0_i32_1 = arith.constant 0 : i32
    return %c0_i32, %c0_i32_0 : i32, i32
  }
  func.func @transform_3(%arg0: i32) -> (i32, i32) {
    %c0_i32 = arith.constant 0 : i32
    %c0_i32_0 = arith.constant 0 : i32
    %c0_i32_1 = arith.constant 0 : i32
    return %c0_i32, %c0_i32_0 : i32, i32
  }
  func.func @transform_4(%arg0: i32) -> (i32, i32) {
    %c0_i32 = arith.constant 0 : i32
    %c0_i32_0 = arith.constant 0 : i32
    %c0_i32_1 = arith.constant 0 : i32
    return %c0_i32, %c0_i32_0 : i32, i32
  }
  func.func @transform_5(%arg0: i32) -> (i32, i32) {
    %c0_i32 = arith.constant 0 : i32
    %c0_i32_0 = arith.constant 0 : i32
    return %arg0, %c0_i32 : i32, i32
  }
}

</mosaic_0001>

<llo_original>
// kernel: tpu_custom_call.1
$region0: #{tpu_custom_call.1}
  #allocation0 [shape = 'u32[]', space=smem, size = 0x4, offset = 0x4, fixed_abs, tag = 'smem constant byte address 0x4 - core index']
  #allocation1 [shape = 'u32[144,128]{1,0:T(1,128)}', space=vmem, size = 0x12000, scoped, tag = 'internal scratch']
  %s0 = inlined_call_operand.vmem [shape: f32[8,16], index: 0, kind: input, shape index: {}]
  %s1 = inlined_call_operand.vmem [shape: f32[16,64], index: 1, kind: input, shape index: {}]
  %s2 = inlined_call_operand.vmem [shape: f32[1,64], index: 2, kind: input, shape index: {}]
  %s3 = inlined_call_operand.vmem [shape: f32[64,8], index: 3, kind: input, shape index: {}]
  %s4 = inlined_call_operand.vmem [shape: f32[1,8], index: 4, kind: input, shape index: {}]
  %s5 = inlined_call_operand.hbm [shape: f32[8,8], index: 5, kind: output, shape index: {}]
  %s6 = sld [smem:[#allocation0]]
  $region30: #{tpu_custom_call.1} parent=0
    _
  %s8 = ssub.s32 1, %s6
  %s9 = scalar_select 0, %s8, %s6
  $region1: #{tpu_custom_call.1} parent=0
    #allocation2 [shape = 'u8[4096]{0}', space=vmem, size = 0x1000, scoped, tag = 'output window, operand 0, single buffered']
    #allocation3 [shape = 's32[1]{0}', space=sflag, size = 0x4, scoped, tag = 'scoped memory for tpu_custom_call.1']
    %10 = vsyncpa [#allocation3], 0
    // Predicated region
    $region2: #{tpu_custom_call.1} parent=1 // pred_check
      _
    $region3: #{tpu_custom_call.1} parent=1 // pred_check_branch
      %12 = sbr.rel (0) target = $region5
    $region4: #{tpu_custom_call.1} parent=1 // pred_region
      _
    $region5: #{tpu_custom_call.1} parent=1 // pred_fallthru
      _
    // Predicated region
    $region6: #{tpu_custom_call.1} parent=1 // pred_check
      _
    $region7: #{tpu_custom_call.1} parent=1 // pred_check_branch
      %14 = sbr.rel (0) target = $region9
    $region8: #{tpu_custom_call.1} parent=1 // pred_region
      _
    $region9: #{tpu_custom_call.1} parent=1 // pred_fallthru
      _
    // Predicated region
    $region10: #{tpu_custom_call.1} parent=1 // pred_check
      _
    $region11: #{tpu_custom_call.1} parent=1 // pred_check_branch
      %16 = sbr.rel (0) target = $region13
    $region12: #{tpu_custom_call.1} parent=1 // pred_region
      _
    $region13: #{tpu_custom_call.1} parent=1 // pred_fallthru
      _
    // Predicated region
    $region14: #{tpu_custom_call.1} parent=1 // pred_check
      _
    $region15: #{tpu_custom_call.1} parent=1 // pred_check_branch
      %18 = sbr.rel (0) target = $region17
    $region16: #{tpu_custom_call.1} parent=1 // pred_region
      _
    $region17: #{tpu_custom_call.1} parent=1 // pred_fallthru
      _
    // Predicated region
    $region18: #{tpu_custom_call.1} parent=1 // pred_check
      _
    $region19: #{tpu_custom_call.1} parent=1 // pred_check_branch
      %20 = sbr.rel (0) target = $region21
    $region20: #{tpu_custom_call.1} parent=1 // pred_region
      _
    $region21: #{tpu_custom_call.1} parent=1 // pred_fallthru
      _
    %v21 = vld [vmem:[%s0] sm:$0xff]
    %v22 = vld [vmem:[%s1] sm:$0xff]
    %v23 = vld [vmem:[%s1 + $0x8] sm:$0xff]
    %v24 = vld [vmem:[%s2] sm:$0x1]
    %v26 = vlaneseq
    %v27 = vshrl.u32 %v26, 7
    %v28 = vsub.s32 0, %v27
    %v29 = vrot.slane %v24, %v28
    %vm31 = vcmask 130048
    %v33 = vsel %vm31, %v21, 0
    %35 = vmatprep.subr.mxu0 0.0
    %36 = vmatpush1.msra.mxu0 %v22
    %37 = vmatprep.subr.mxu0 0.0
    %38 = vmatpush1.msra.mxu0 %v23
    %39 = vmatprep.subr.mxu0 0.0
    %40 = vmatpush1.msra.mxu0 0.0
    %41 = vmatprep.subr.mxu0 0.0
    %42 = vmatpush1.msra.mxu0 0.0
    %43 = vmatprep.subr.mxu0 0.0
    %44 = vmatpush1.msra.mxu0 0.0
    %45 = vmatprep.subr.mxu0 0.0
    %46 = vmatpush1.msra.mxu0 0.0
    %47 = vmatprep.subr.mxu0 0.0
    %48 = vmatpush1.msra.mxu0 0.0
    %49 = vmatprep.subr.mxu0 0.0
    %50 = vmatpush1.msra.mxu0 0.0
    %51 = vmatprep.subr.mxu0 0.0
    %52 = vmatpush1.msra.mxu0 0.0
    %53 = vmatprep.subr.mxu0 0.0
    %54 = vmatpush1.msra.mxu0 0.0
    %55 = vmatprep.subr.mxu0 0.0
    %56 = vmatpush1.msra.mxu0 0.0
    %57 = vmatprep.subr.mxu0 0.0
    %58 = vmatpush1.msra.mxu0 0.0
    %59 = vmatprep.subr.mxu0 0.0
    %60 = vmatpush1.msra.mxu0 0.0
    %61 = vmatprep.subr.mxu0 0.0
    %62 = vmatpush1.msra.mxu0 0.0
    %63 = vmatprep.subr.mxu0 0.0
    %64 = vmatpush1.msra.mxu0 0.0
    %65 = vmatprep.subr.mxu0 0.0
    %66 = vmatpush1.msra.mxu0 0.0
    %67 = vmatprep.subr.mxu0 0.0
    %68 = vmatpush1.msra.mxu0 0.0
    %69 = vmatprep.subr.mxu0 0.0
    %70 = vmatpush1.msra.mxu0 0.0
    %71 = vmatprep.subr.mxu0 0.0
    %72 = vmatpush1.msra.mxu0 0.0
    %73 = vmatprep.subr.mxu0 0.0
    %74 = vmatpush1.msra.mxu0 0.0
    %75 = vmatprep.subr.mxu0 0.0
    %76 = vmatpush1.msra.mxu0 0.0
    %77 = vmatprep.subr.mxu0 0.0
    %78 = vmatpush1.msra.mxu0 0.0
    %79 = vmatprep.subr.mxu0 0.0
    %80 = vmatpush1.msra.mxu0 0.0
    %81 = vmatprep.subr.mxu0 0.0
    %82 = vmatpush1.msra.mxu0 0.0
    %83 = vmatprep.subr.mxu0 0.0
    %84 = vmatpush1.msra.mxu0 0.0
    %85 = vmatprep.subr.mxu0 0.0
    %86 = vmatpush1.msra.mxu0 0.0
    %87 = vmatprep.subr.mxu0 0.0
    %88 = vmatpush1.msra.mxu0 0.0
    %89 = vmatprep.subr.mxu0 0.0
    %90 = vmatpush1.msra.mxu0 0.0
    %91 = vmatprep.subr.mxu0 0.0
    %92 = vmatpush1.msra.mxu0 0.0
    %93 = vmatprep.subr.mxu0 0.0
    %94 = vmatpush1.msra.mxu0 0.0
    %95 = vmatprep.subr.mxu0 0.0
    %96 = vmatpush1.msra.mxu0 0.0
    %97 = vmatprep.subr.mxu0 0.0
    %98 = vmatpush1.msra.mxu0 0.0
    %99 = vmatprep.mubr.f32.mxu0 0.0
    %100 = vmatmul.mubr.f32.gmra.mrb[0].mxu0 %v33
    %v101 = vpop.f32.mrb[0].mxu0
    %v102 = vadd.f32 %v29, %v101
    %v103 = vpop.f32.mrb[0].mxu0
    %104 = vdwg.mxu0
    %v105 = vmax.f32 %v102, 0.0
    %v106 = vld [vmem:[%s3] sm:$0xff]
    %v107 = vld [vmem:[%s3 + $0x8] sm:$0xff]
    %v108 = vld [vmem:[%s3 + $0x10] sm:$0xff]
    %v109 = vld [vmem:[%s3 + $0x18] sm:$0xff]
    %v110 = vld [vmem:[%s3 + $0x20] sm:$0xff]
    %v111 = vld [vmem:[%s3 + $0x28] sm:$0xff]
    %v112 = vld [vmem:[%s3 + $0x30] sm:$0xff]
    %v113 = vld [vmem:[%s3 + $0x38] sm:$0xff]
    %v114 = vld [vmem:[%s4] sm:$0x1]
    %v116 = vlaneseq
    %v117 = vshrl.u32 %v116, 7
    %v118 = vsub.s32 0, %v117
    %v119 = vrot.slane %v114, %v118
    %vm121 = vcmask 523264
    %v123 = vsel %vm121, %v105, 0
    %125 = vmatprep.subr.mxu0 0.0
    %126 = vmatpush1.msra.mxu0 %v106
    %127 = vmatprep.subr.mxu0 0.0
    %128 = vmatpush1.msra.mxu0 %v107
    %129 = vmatprep.subr.mxu0 0.0
    %130 = vmatpush1.msra.mxu0 %v108
    %131 = vmatprep.subr.mxu0 0.0
    %132 = vmatpush1.msra.mxu0 %v109
    %133 = vmatprep.subr.mxu0 0.0
    %134 = vmatpush1.msra.mxu0 %v110
    %135 = vmatprep.subr.mxu0 0.0
    %136 = vmatpush1.msra.mxu0 %v111
    %137 = vmatprep.subr.mxu0 0.0
    %138 = vmatpush1.msra.mxu0 %v112
    %139 = vmatprep.subr.mxu0 0.0
    %140 = vmatpush1.msra.mxu0 %v113
    %141 = vmatprep.subr.mxu0 0.0
    %142 = vmatpush1.msra.mxu0 0.0
    %143 = vmatprep.subr.mxu0 0.0
    %144 = vmatpush1.msra.mxu0 0.0
    %145 = vmatprep.subr.mxu0 0.0
    %146 = vmatpush1.msra.mxu0 0.0
    %147 = vmatprep.subr.mxu0 0.0
    %148 = vmatpush1.msra.mxu0 0.0
    %149 = vmatprep.subr.mxu0 0.0
    %150 = vmatpush1.msra.mxu0 0.0
    %151 = vmatprep.subr.mxu0 0.0
    %152 = vmatpush1.msra.mxu0 0.0
    %153 = vmatprep.subr.mxu0 0.0
    %154 = vmatpush1.msra.mxu0 0.0
    %155 = vmatprep.subr.mxu0 0.0
    %156 = vmatpush1.msra.mxu0 0.0
    %157 = vmatprep.subr.mxu0 0.0
    %158 = vmatpush1.msra.mxu0 0.0
    %159 = vmatprep.subr.mxu0 0.0
    %160 = vmatpush1.msra.mxu0 0.0
    %161 = vmatprep.subr.mxu0 0.0
    %162 = vmatpush1.msra.mxu0 0.0
    %163 = vmatprep.subr.mxu0 0.0
    %164 = vmatpush1.msra.mxu0 0.0
    %165 = vmatprep.subr.mxu0 0.0
    %166 = vmatpush1.msra.mxu0 0.0
    %167 = vmatprep.subr.mxu0 0.0
    %168 = vmatpush1.msra.mxu0 0.0
    %169 = vmatprep.subr.mxu0 0.0
    %170 = vmatpush1.msra.mxu0 0.0
    %171 = vmatprep.subr.mxu0 0.0
    %172 = vmatpush1.msra.mxu0 0.0
    %173 = vmatprep.subr.mxu0 0.0
    %174 = vmatpush1.msra.mxu0 0.0
    %175 = vmatprep.subr.mxu0 0.0
    %176 = vmatpush1.msra.mxu0 0.0
    %177 = vmatprep.subr.mxu0 0.0
    %178 = vmatpush1.msra.mxu0 0.0
    %179 = vmatprep.subr.mxu0 0.0
    %180 = vmatpush1.msra.mxu0 0.0
    %181 = vmatprep.subr.mxu0 0.0
    %182 = vmatpush1.msra.mxu0 0.0
    %183 = vmatprep.subr.mxu0 0.0
    %184 = vmatpush1.msra.mxu0 0.0
    %185 = vmatprep.subr.mxu0 0.0
    %186 = vmatpush1.msra.mxu0 0.0
    %187 = vmatprep.subr.mxu0 0.0
    %188 = vmatpush1.msra.mxu0 0.0
    %189 = vmatprep.mubr.f32.mxu0 0.0
    %190 = vmatmul.mubr.f32.gmra.mrb[0].mxu0 %v123
    %v191 = vpop.f32.mrb[0].mxu0
    %v192 = vadd.f32 %v119, %v191
    %v193 = vpop.f32.mrb[0].mxu0
    %194 = vdwg.mxu0
    %v195 = vlaneseq
    %v196 = vand.u32 %v195, 127
    %v197 = vtanh.pop %v192
    %v198 = vmul.f32 %v197, 3.5
    %v199 = vadd.f32 %v198, -1.5
    %vm200 = vcmp.ge.s32.totalorder %v196, 4
    %v201 = vsel %vm200, %v199, %v192
    %vm202 = vcmask 64512
    %203 = vst.msk [vmem:[#allocation2] sm:$0xff] %vm202, %v201
    // Predicated region
    $region22: #{tpu_custom_call.1} parent=1 // pred_check
      _
    $region23: #{tpu_custom_call.1} parent=1 // pred_check_branch
      %205 = sbr.rel (0) target = $region25
    $region24: #{tpu_custom_call.1} parent=1 // pred_region
      %s207 = ssub.s32 128, 128
      %208 = vsyncadd [#allocation3], %s207
      %s210 = sshll.u32 [#allocation2], 4
      %s211 = int_to_ptr.vmem [resolvable:$true] %s210
      %213 = dma.vmem_to_hbm [thread:$0]  %s211, 128, %s5, [#allocation3]
    $region25: #{tpu_custom_call.1} parent=1 // pred_fallthru
      _
    // Predicated region
    $region26: #{tpu_custom_call.1} parent=1 // pred_check
      _
    $region27: #{tpu_custom_call.1} parent=1 // pred_check_branch
      %215 = sbr.rel (0) target = $region29
    $region28: #{tpu_custom_call.1} parent=1 // pred_region
      %216 = dma.done [#allocation3], 128
    $region29: #{tpu_custom_call.1} parent=1 // pred_fallthru
      _
    %217 = vsyncpa [#allocation3], 1

</llo_original>
